<compile_context>
chip_gen: v7x
topology: tpu7x:2x2x1
jax: 0.10.0
libtpu: 0.0.40
codegen_flags: <defaults>
</compile_context>

<pallas_src>
import math

import jax
import jax.numpy as jnp
from jax import lax
from jax.experimental import pallas as pl
from jax.experimental.pallas import tpu as pltpu


def _token_conv_kernel(xcol_ref, w_ref, o_ref):
    """xcol_ref: (TB, L, K*C_in), w_ref: (K*C_in, D_pad), o_ref: (TB, L, D_pad)."""
    tb, l, kc = xcol_ref.shape
    x2d = xcol_ref[...].reshape(tb * l, kc)            # fold batch + time into MXU M-dim
    y = jnp.dot(x2d, w_ref[...], preferred_element_type=jnp.float32)
    o_ref[...] = y.reshape(tb, l, o_ref.shape[-1]).astype(o_ref.dtype)


def token_embedding_forward(x, w_col_padded, d_model, *, block_batch=None,
                            compute_dtype=jnp.float32):
    """x: (B, L, c_in) float32.  w_col_padded: (3*c_in, D_pad) im2col'd weight.

    Returns (B, L, d_model) float32.
    """
    B, L, _ = x.shape
    KC, D_pad = w_col_padded.shape

    # im2col of the K=3 circular taps into the contraction dim (wrapper-side layout
    # plumbing): column k*c_in + c holds x[b, (t + k - 1) mod L, c].
    x_col = jnp.concatenate(
        [jnp.roll(x, 1, axis=1), x, jnp.roll(x, -1, axis=1)], axis=-1)
    x_col = x_col.astype(compute_dtype)
    w_col = w_col_padded.astype(compute_dtype)

    if block_batch is None:
        # >= 2 grid steps when B >= 2 (keeps both v7x TensorCores busy), otherwise
        # everything folds into a single matmul.
        block_batch = max(1, B // 2)
    n_steps = -(-B // block_batch)
    b_pad = n_steps * block_batch
    if b_pad != B:
        x_col = jnp.pad(x_col, ((0, b_pad - B), (0, 0), (0, 0)))

    out = pl.pallas_call(
        _token_conv_kernel,
        out_shape=jax.ShapeDtypeStruct((b_pad, L, D_pad), jnp.float32),
        grid=(n_steps,),
        in_specs=[
            pl.BlockSpec((block_batch, L, KC), lambda i: (i, 0, 0)),
            pl.BlockSpec((KC, D_pad), lambda i: (0, 0)),   # weight stays VMEM-resident
        ],
        out_specs=pl.BlockSpec((block_batch, L, D_pad), lambda i: (i, 0, 0)),
        compiler_params=pltpu.CompilerParams(dimension_semantics=("parallel",)),
    )(x_col, w_col)

    return out[:B, :, :d_model]


class TokenEmbeddingPallas:
    """Pallas version of TokenEmbedding: circular Conv1d(c_in -> d_model, k=3, pad=1, no bias)."""

    def __init__(self, c_in, d_model, key):
        K = 3
        # kaiming_normal_(mode='fan_in', nonlinearity='leaky_relu') ~ N(0, 2 / (c_in*K))
        std = math.sqrt(2.0 / (c_in * K))
        self.weight = std * jax.random.normal(key, (d_model, c_in, K), jnp.float32)  # OIH
        self.c_in, self.d_model = c_in, d_model
        # Hoisted weight transform: (O, I, K) -> (K*I, O), zero-padded on the output
        # channel dim to a multiple of 128 for lane-dense stores in the kernel.
        w_col = jnp.transpose(self.weight, (2, 1, 0)).reshape(K * c_in, d_model)
        d_pad = ((d_model + 127) // 128) * 128
        self.w_col_padded = jnp.pad(w_col, ((0, 0), (0, d_pad - d_model)))

    def __call__(self, x, compute_dtype=jnp.float32):
        return token_embedding_forward(x, self.w_col_padded, self.d_model,
                                       compute_dtype=compute_dtype)


def reference_forward(x, w):
    """Pure-JAX replica of the PyTorch forward for verification."""
    x_ncl = jnp.transpose(x, (0, 2, 1))                                    # x.permute(0, 2, 1)
    x_pad = jnp.concatenate([x_ncl[:, :, -1:], x_ncl, x_ncl[:, :, :1]], axis=-1)  # circular pad=1
    y = lax.conv_general_dilated(x_pad, w, window_strides=(1,), padding=[(0, 0)],
                                 dimension_numbers=("NCH", "OIH", "NCH"))
    return jnp.transpose(y, (0, 2, 1))                                     # .transpose(1, 2)


if __name__ == "__main__":
    B, L, c_in, d_model = 2, 16, 8, 32

    key = jax.random.PRNGKey(0)
    k_x, k_w = jax.random.split(key)
    x = jax.random.normal(k_x, (B, L, c_in), jnp.float32)

    model = TokenEmbeddingPallas(c_in, d_model, key=k_w)
    ref = jax.block_until_ready(reference_forward(x, model.weight))

    # float32 path (tight check against the pure-JAX reference).
    out = jax.block_until_ready(model(x))
    assert out.shape == ref.shape, (out.shape, ref.shape)
    assert jnp.allclose(out, ref, rtol=1e-4, atol=1e-4), float(jnp.max(jnp.abs(out - ref)))

    # bfloat16-input path (f32 accumulation) — the fast MXU path on v5e/v6e.
    out_bf16 = jax.block_until_ready(model(x, compute_dtype=jnp.bfloat16))
    assert out_bf16.shape == ref.shape
    assert jnp.allclose(out_bf16, ref, rtol=5e-2, atol=5e-2), \
        float(jnp.max(jnp.abs(out_bf16 - ref)))

    print("KERNEL_OK")
</pallas_src>

<mosaic_0001>
module attributes {stable_mosaic.version = 11 : i64} {
  func.func @_token_conv_kernel(%arg0: i32, %arg1: memref<1x16x24xf32, #tpu.memory_space<vmem>>, %arg2: memref<24x128xf32, #tpu.memory_space<vmem>>, %arg3: memref<1x16x128xf32, #tpu.memory_space<vmem>>) attributes {dimension_semantics = [#tpu.dimension_semantics<parallel>], iteration_bounds = array<i64: 2>, scalar_prefetch = 0 : i64, scratch_operands = 0 : i64, tpu.core_type = #tpu.core_type<tc>, window_params = [{transform_indices = @transform_0, window_bounds = array<i64: 1, 16, 24>}, {pipeline_mode = #tpu.pipeline_mode<synchronous>, transform_indices = @transform_1, window_bounds = array<i64: 24, 128>}, {transform_indices = @transform_2, window_bounds = array<i64: 1, 16, 128>}]} {
    %c0 = arith.constant 0 : index
    %c0_0 = arith.constant 0 : index
    %c0_1 = arith.constant 0 : index
    %0 = vector.load %arg1[%c0, %c0_0, %c0_1] : memref<1x16x24xf32, #tpu.memory_space<vmem>>, vector<1x16x24xf32>
    %1 = vector.shape_cast %0 : vector<1x16x24xf32> to vector<16x24xf32>
    %c0_2 = arith.constant 0 : index
    %c0_3 = arith.constant 0 : index
    %2 = vector.load %arg2[%c0_2, %c0_3] : memref<24x128xf32, #tpu.memory_space<vmem>>, vector<24x128xf32>
    %cst = arith.constant dense<0.000000e+00> : vector<16x128xf32>
    %3 = tpu.matmul %1, %2, %cst {dimension_numbers = #tpu.dot_dimension_numbers<[1], [0], [0], [1], [0, 0, 1, 1], [], []>} : vector<16x24xf32>, vector<24x128xf32>, vector<16x128xf32> -> vector<16x128xf32>
    %4 = vector.shape_cast %3 : vector<16x128xf32> to vector<1x16x128xf32>
    %c0_4 = arith.constant 0 : index
    %c0_5 = arith.constant 0 : index
    %c0_6 = arith.constant 0 : index
    %5 = vector.load %arg3[%c0_4, %c0_5, %c0_6] : memref<1x16x128xf32, #tpu.memory_space<vmem>>, vector<1x16x128xf32>
    tpu.vector_store %arg3[%c0_4, %c0_5, %c0_6], %4 {strides = array<i32>} : memref<1x16x128xf32, #tpu.memory_space<vmem>>, vector<1x16x128xf32>,
    return
  }
  func.func @transform_0(%arg0: i32) -> (i32, i32, i32) {
    %c0_i32 = arith.constant 0 : i32
    %c0_i32_0 = arith.constant 0 : i32
    %c0_i32_1 = arith.constant 0 : i32
    return %arg0, %c0_i32, %c0_i32_0 : i32, i32, i32
  }
  func.func @transform_1(%arg0: i32) -> (i32, i32) {
    %c0_i32 = arith.constant 0 : i32
    %c0_i32_0 = arith.constant 0 : i32
    %c0_i32_1 = arith.constant 0 : i32
    return %c0_i32, %c0_i32_0 : i32, i32
  }
  func.func @transform_2(%arg0: i32) -> (i32, i32, i32) {
    %c0_i32 = arith.constant 0 : i32
    %c0_i32_0 = arith.constant 0 : i32
    %c0_i32_1 = arith.constant 0 : i32
    return %arg0, %c0_i32, %c0_i32_0 : i32, i32, i32
  }
}

</mosaic_0001>

<llo_original>
// kernel: tpu_custom_call.1
$region0: #{tpu_custom_call.1}
  #allocation0 [shape = 'u32[]', space=smem, size = 0x4, offset = 0x4, fixed_abs, tag = 'smem constant byte address 0x4 - core index']
  #allocation1 [shape = 'u32[144,128]{1,0:T(1,128)}', space=vmem, size = 0x12000, scoped, tag = 'internal scratch']
  %s0 = inlined_call_operand.hbm [shape: f32[2,16,24], index: 0, kind: input, shape index: {}]
  %s1 = inlined_call_operand.hbm [shape: f32[24,128], index: 1, kind: input, shape index: {}]
  %s2 = inlined_call_operand.hbm [shape: f32[2,16,128], index: 2, kind: output, shape index: {}]
  %s3 = sld [smem:[#allocation0]]
  $region49: #{tpu_custom_call.1} parent=0
    _
  %s5 = ssub.s32 1, %s3
  %s6 = scalar_select 0, %s5, %s3
  $region1: #{tpu_custom_call.1} parent=0
    #allocation2 [shape = 'u8[16384]{0}', space=vmem, size = 0x4000, scoped, tag = 'input window, operand 0']
    #allocation3 [shape = 's32[2]{0}', space=sflag, size = 0x8, scoped, tag = 'scoped memory for tpu_custom_call.1']
    #allocation4 [shape = 's32[2]{0}', space=sflag, size = 0x8, scoped, tag = 'scoped memory for tpu_custom_call.1']
    #allocation5 [shape = 'u8[12288]{0}', space=vmem, size = 0x3000, scoped, tag = 'input window, operand 1, single buffered']
    #allocation6 [shape = 's32[1]{0}', space=sflag, size = 0x4, scoped, tag = 'scoped memory for tpu_custom_call.1']
    #allocation7 [shape = 'u8[16384]{0}', space=vmem, size = 0x4000, scoped, tag = 'output window, operand 0']
    %7 = vsyncpa [#allocation3], 0
    %s8 = scalar_lea.sflag [#allocation3], 1
    %9 = vsyncpa %s8, 0
    %10 = vsyncpa [#allocation6], 0
    %11 = vsyncpa [#allocation4], 0
    %s12 = scalar_lea.sflag [#allocation4], 1
    %13 = vsyncpa %s12, 0
    loop: start=0, step=1, limit=4
    $region2: #{tpu_custom_call.1} parent=1 // loop_pre_header
      _
    $region3: #{tpu_custom_call.1} parent=1 // loop_header
      %s15 = sphi 0, %s19
      %p16 = scmp.ge.s32.totalorder %s15, 4
      %s25 = sphi 0, %s27
      %s28 = sphi 0, %s25
      %s29 = sphi 0, %s28
      %s45 = sphi 0, %s29
      %s49 = sphi 0, %s49
      %s51 = sphi 0, %s49
      %s52 = sphi 0, %s51
      %s66 = sphi 0, %s52
      %s72 = sphi 0, %s74
      %s75 = sphi 0, %s72
      %s76 = sphi 0, %s75
      %s92 = sphi 0, %s76
    $region4: #{tpu_custom_call.1} parent=1 // loop_header_branch
      %18 = sbr.rel (%p16) target = $region8
    $region5: #{tpu_custom_call.1} parent=1 // loop_body
      %s20 = ssub.s32 %s15, 1
      %s21 = ssub.s32 %s15, 2
      %s22 = sadd.s32 %s15, 1
      %s23 = ssub.s32 %s15, %s22
      %p24 = scmp.eq.s32.totalorder %s23, 0
      %s26 = sadd.s32 %s25, 1
      %s27 = scalar_select %p24, %s25, %s26
      %p30 = pneg %p24
      %p31 = scmp.eq.s32.totalorder %s15, 1
      %p32 = por %p30, %p31
      %p33 = scmp.ne.s32.totalorder %s25, %s28
      %p34 = scmp.eq.s32.totalorder %s15, 0
      %p35 = por %p33, %p34
      %p36 = scmp.ne.s32.totalorder %s25, %s28
      %p37 = scmp.eq.s32.totalorder %s20, 1
      %p38 = por %p36, %p37
      %p39 = scmp.ne.s32.totalorder %s28, %s29
      %p40 = scmp.eq.s32.totalorder %s20, 0
      %p41 = por %p39, %p40
      %p42 = scmp.ne.s32.totalorder %s28, %s29
      %p43 = scmp.eq.s32.totalorder %s21, 1
      %p44 = por %p42, %p43
      %p46 = scmp.ne.s32.totalorder %s29, %s45
      %p47 = scmp.eq.s32.totalorder %s21, 0
      %p48 = por %p46, %p47
      %s50 = sadd.s32 %s49, 1
      %p53 = scmp.eq.s32.totalorder %s15, 1
      %p54 = scmp.ne.s32.totalorder %s49, %s51
      %p55 = scmp.eq.s32.totalorder %s15, 0
      %p56 = por %p54, %p55
      %p57 = scmp.ne.s32.totalorder %s49, %s51
      %p58 = scmp.eq.s32.totalorder %s20, 1
      %p59 = por %p57, %p58
      %p60 = scmp.ne.s32.totalorder %s51, %s52
      %p61 = scmp.eq.s32.totalorder %s20, 0
      %p62 = por %p60, %p61
      %p63 = scmp.ne.s32.totalorder %s51, %s52
      %p64 = scmp.eq.s32.totalorder %s21, 1
      %p65 = por %p63, %p64
      %p67 = scmp.ne.s32.totalorder %s52, %s66
      %p68 = scmp.eq.s32.totalorder %s21, 0
      %p69 = por %p67, %p68
      %s70 = ssub.s32 %s15, %s22
      %p71 = scmp.eq.s32.totalorder %s70, 0
      %s73 = sadd.s32 %s72, 1
      %s74 = scalar_select %p71, %s72, %s73
      %p77 = pneg %p71
      %p78 = scmp.eq.s32.totalorder %s15, 1
      %p79 = por %p77, %p78
      %p80 = scmp.ne.s32.totalorder %s72, %s75
      %p81 = scmp.eq.s32.totalorder %s15, 0
      %p82 = por %p80, %p81
      %p83 = scmp.ne.s32.totalorder %s72, %s75
      %p84 = scmp.eq.s32.totalorder %s20, 1
      %p85 = por %p83, %p84
      %p86 = scmp.ne.s32.totalorder %s75, %s76
      %p87 = scmp.eq.s32.totalorder %s20, 0
      %p88 = por %p86, %p87
      %p89 = scmp.ne.s32.totalorder %s75, %s76
      %p90 = scmp.eq.s32.totalorder %s21, 1
      %p91 = por %p89, %p90
      %p93 = scmp.ne.s32.totalorder %s76, %s92
      %p94 = scmp.eq.s32.totalorder %s21, 0
      %p95 = por %p93, %p94
      %p96 = scmp.le.s32.totalorder 1, %s15
      %p97 = scmp.lt.s32.totalorder %s15, 3
      %p98 = pnand %p96, %p97
      %p99 = pneg %p98
      // Predicated region
      $region9: #{tpu_custom_call.1} parent=5 // pred_check
        _
      $region10: #{tpu_custom_call.1} parent=5 // pred_check_branch
        %101 = sbr.rel (%p98) target = $region12
      $region11: #{tpu_custom_call.1} parent=5 // pred_region
        %s102 = ssub.s32 %s15, 1
        // Predicated region
        $region13: #{tpu_custom_call.1} parent=11 // pred_check
          %p103 = pneg %p62
        $region14: #{tpu_custom_call.1} parent=11 // pred_check_branch
          %105 = sbr.rel (%p103) target = $region16
        $region15: #{tpu_custom_call.1} parent=11 // pred_region
          %s107 = ssub.s32 384, 384
          %108 = vsyncadd [#allocation6], %s107
          %s109 = sshll.u32 [#allocation5], 4
          %s110 = int_to_ptr.vmem [resolvable:$true] %s109
          %115 = dma.hbm_to_vmem [thread:$0]  %s1, 384, %s110, [#allocation6], 128, 128, 8
        $region16: #{tpu_custom_call.1} parent=11 // pred_fallthru
          _
      $region12: #{tpu_custom_call.1} parent=5 // pred_fallthru
        _
      %p116 = scmp.lt.s32.totalorder %s15, 2
      // Predicated region
      $region17: #{tpu_custom_call.1} parent=5 // pred_check
        %p117 = pneg %p116
      $region18: #{tpu_custom_call.1} parent=5 // pred_check_branch
        %119 = sbr.rel (%p117) target = $region20
      $region19: #{tpu_custom_call.1} parent=5 // pred_region
        // Predicated region
        $region21: #{tpu_custom_call.1} parent=19 // pred_check
          %p120 = pneg %p35
        $region22: #{tpu_custom_call.1} parent=19 // pred_check_branch
          %122 = sbr.rel (%p120) target = $region24
        $region23: #{tpu_custom_call.1} parent=19 // pred_region
          %s123 = sand.u32 %s25, 1
          %s124 = scalar_lea.sflag [#allocation3], %s123
          %s125 = sand.u32 %s25, 1
          %s126 = smul.addr %s125, 16
          %s127 = scalar_lea.vmem [#allocation2], %s126
          %s129 = ssub.s32 256, 256
          %130 = vsyncadd %s124, %s129
          %s131 = smul.addr %s15, 2
          %s132 = smul.addr %s131, 128
          %s133 = scalar_lea.hbm %s0, %s132
          %s134 = sshll.u32 %s127, 4
          %s135 = int_to_ptr.vmem [resolvable:$true] %s134
          %140 = dma.hbm_to_vmem [thread:$0]  %s133, 256, %s135, %s124, 128, 128, 8
        $region24: #{tpu_custom_call.1} parent=19 // pred_fallthru
          _
      $region20: #{tpu_custom_call.1} parent=5 // pred_fallthru
        _
      %p141 = scmp.le.s32.totalorder 1, %s15
      %p142 = scmp.lt.s32.totalorder %s15, 3
      %p143 = pnand %p141, %p142
      %p144 = pneg %p143
      // Predicated region
      $region25: #{tpu_custom_call.1} parent=5 // pred_check
        _
      $region26: #{tpu_custom_call.1} parent=5 // pred_check_branch
        %146 = sbr.rel (%p143) target = $region28
      $region27: #{tpu_custom_call.1} parent=5 // pred_region
        %s147 = ssub.s32 %s15, 1
        %s148 = sand.u32 %s28, 1
        %s149 = scalar_lea.sflag [#allocation3], %s148
        %s150 = sand.u32 %s28, 1
        %s151 = smul.addr %s150, 16
        %s152 = scalar_lea.vmem [#allocation2], %s151
        // Predicated region
        $region29: #{tpu_custom_call.1} parent=27 // pred_check
          %p153 = pneg %p41
        $region30: #{tpu_custom_call.1} parent=27 // pred_check_branch
          %155 = sbr.rel (%p153) target = $region32
        $region31: #{tpu_custom_call.1} parent=27 // pred_region
          %156 = dma.done %s149, 256
        $region32: #{tpu_custom_call.1} parent=27 // pred_fallthru
          _
        // Predicated region
        $region33: #{tpu_custom_call.1} parent=27 // pred_check
          %p157 = pneg %p62
        $region34: #{tpu_custom_call.1} parent=27 // pred_check_branch
          %159 = sbr.rel (%p157) target = $region36
        $region35: #{tpu_custom_call.1} parent=27 // pred_region
          %160 = dma.done [#allocation6], 384
        $region36: #{tpu_custom_call.1} parent=27 // pred_fallthru
          _
        %s161 = sand.u32 %s28, 1
        %s162 = scalar_lea.sflag [#allocation3], %s161
        %s163 = sand.u32 %s28, 1
        %s164 = smul.addr %s163, 16
        %s165 = scalar_lea.vmem [#allocation2], %s164
        %p166 = pneg %p41
        %p167 = pneg %p38
        %p168 = pneg %p62
        %p169 = pneg %p59
        %p170 = pneg %p88
        %p171 = pneg %p85
        %s172 = sand.u32 %s75, 1
        %s173 = scalar_lea.sflag [#allocation4], %s172
        %s174 = sand.u32 %s75, 1
        %s175 = smul.addr %s174, 16
        %s176 = scalar_lea.vmem [#allocation7], %s175
        %v177 = vld [vmem:[%s152] sm:$0xff]
        %v178 = vld [vmem:[%s152 + $0x8] sm:$0xff]
        %v179 = vld [vmem:[#allocation5] sm:$0xff]
        %v180 = vld [vmem:[#allocation5 + $0x8] sm:$0xff]
        %v181 = vld [vmem:[#allocation5 + $0x10] sm:$0xff]
        %vm182 = vcmask 195584
        %v184 = vsel %vm182, %v177, 0
        %v187 = vsel %vm182, %v178, 0
        %189 = vmatprep.subr.mxu0 0.0
        %190 = vmatpush1.msra.mxu0 %v179
        %191 = vmatprep.subr.mxu0 0.0
        %192 = vmatpush1.msra.mxu0 %v180
        %193 = vmatprep.subr.mxu0 0.0
        %194 = vmatpush1.msra.mxu0 %v181
        %195 = vmatprep.subr.mxu0 0.0
        %196 = vmatpush1.msra.mxu0 0.0
        %197 = vmatprep.subr.mxu0 0.0
        %198 = vmatpush1.msra.mxu0 0.0
        %199 = vmatprep.subr.mxu0 0.0
        %200 = vmatpush1.msra.mxu0 0.0
        %201 = vmatprep.subr.mxu0 0.0
        %202 = vmatpush1.msra.mxu0 0.0
        %203 = vmatprep.subr.mxu0 0.0
        %204 = vmatpush1.msra.mxu0 0.0
        %205 = vmatprep.subr.mxu0 0.0
        %206 = vmatpush1.msra.mxu0 0.0
        %207 = vmatprep.subr.mxu0 0.0
        %208 = vmatpush1.msra.mxu0 0.0
        %209 = vmatprep.subr.mxu0 0.0
        %210 = vmatpush1.msra.mxu0 0.0
        %211 = vmatprep.subr.mxu0 0.0
        %212 = vmatpush1.msra.mxu0 0.0
        %213 = vmatprep.subr.mxu0 0.0
        %214 = vmatpush1.msra.mxu0 0.0
        %215 = vmatprep.subr.mxu0 0.0
        %216 = vmatpush1.msra.mxu0 0.0
        %217 = vmatprep.subr.mxu0 0.0
        %218 = vmatpush1.msra.mxu0 0.0
        %219 = vmatprep.subr.mxu0 0.0
        %220 = vmatpush1.msra.mxu0 0.0
        %221 = vmatprep.subr.mxu0 0.0
        %222 = vmatpush1.msra.mxu0 0.0
        %223 = vmatprep.subr.mxu0 0.0
        %224 = vmatpush1.msra.mxu0 0.0
        %225 = vmatprep.subr.mxu0 0.0
        %226 = vmatpush1.msra.mxu0 0.0
        %227 = vmatprep.subr.mxu0 0.0
        %228 = vmatpush1.msra.mxu0 0.0
        %229 = vmatprep.subr.mxu0 0.0
        %230 = vmatpush1.msra.mxu0 0.0
        %231 = vmatprep.subr.mxu0 0.0
        %232 = vmatpush1.msra.mxu0 0.0
        %233 = vmatprep.subr.mxu0 0.0
        %234 = vmatpush1.msra.mxu0 0.0
        %235 = vmatprep.subr.mxu0 0.0
        %236 = vmatpush1.msra.mxu0 0.0
        %237 = vmatprep.subr.mxu0 0.0
        %238 = vmatpush1.msra.mxu0 0.0
        %239 = vmatprep.subr.mxu0 0.0
        %240 = vmatpush1.msra.mxu0 0.0
        %241 = vmatprep.subr.mxu0 0.0
        %242 = vmatpush1.msra.mxu0 0.0
        %243 = vmatprep.subr.mxu0 0.0
        %244 = vmatpush1.msra.mxu0 0.0
        %245 = vmatprep.subr.mxu0 0.0
        %246 = vmatpush1.msra.mxu0 0.0
        %247 = vmatprep.subr.mxu0 0.0
        %248 = vmatpush1.msra.mxu0 0.0
        %249 = vmatprep.subr.mxu0 0.0
        %250 = vmatpush1.msra.mxu0 0.0
        %251 = vmatprep.subr.mxu0 0.0
        %252 = vmatpush1.msra.mxu0 0.0
        %253 = vmatprep.mubr.f32.mxu0 0.0
        %254 = vmatmul.mubr.f32.gmra.mrb[0].mxu0 %v184
        %v255 = vpop.f32.mrb[0].mxu0
        %v256 = vadd.f32 0.0, %v255
        %v257 = vpop.f32.mrb[0].mxu0
        %258 = vmatprep.mubr.f32.mxu0 0.0
        %259 = vmatmul.mubr.f32.gmra.mrb[0].mxu0 %v187
        %v260 = vpop.f32.mrb[0].mxu0
        %v261 = vadd.f32 0.0, %v260
        %v262 = vpop.f32.mrb[0].mxu0
        %263 = vdwg.mxu0
        %264 = vst [vmem:[%s176] sm:$0xff] %v256
        %265 = vst [vmem:[%s176 + $0x8] sm:$0xff] %v261
        %s266 = sand.u32 %s75, 1
        %s267 = scalar_lea.sflag [#allocation4], %s266
        %s268 = sand.u32 %s75, 1
        %s269 = smul.addr %s268, 16
        %s270 = scalar_lea.vmem [#allocation7], %s269
        // Predicated region
        $region37: #{tpu_custom_call.1} parent=27 // pred_check
          %p271 = pneg %p85
        $region38: #{tpu_custom_call.1} parent=27 // pred_check_branch
          %273 = sbr.rel (%p271) target = $region40
        $region39: #{tpu_custom_call.1} parent=27 // pred_region
          %s275 = ssub.s32 256, 256
          %276 = vsyncadd %s267, %s275
          %s277 = smul.addr %s20, 2
          %s278 = smul.addr %s277, 128
          %s279 = scalar_lea.hbm %s2, %s278
          %s280 = sshll.u32 %s270, 4
          %s281 = int_to_ptr.vmem [resolvable:$true] %s280
          %286 = dma.vmem_to_hbm [thread:$0]  %s281, 256, %s279, %s267, 128, 128, 8
        $region40: #{tpu_custom_call.1} parent=27 // pred_fallthru
          _
      $region28: #{tpu_custom_call.1} parent=5 // pred_fallthru
        _
      %p287 = scmp.le.s32.totalorder 2, %s15
      // Predicated region
      $region41: #{tpu_custom_call.1} parent=5 // pred_check
        %p288 = pneg %p287
      $region42: #{tpu_custom_call.1} parent=5 // pred_check_branch
        %290 = sbr.rel (%p288) target = $region44
      $region43: #{tpu_custom_call.1} parent=5 // pred_region
        %s291 = ssub.s32 %s15, 2
        // Predicated region
        $region45: #{tpu_custom_call.1} parent=43 // pred_check
          %p292 = pneg %p91
        $region46: #{tpu_custom_call.1} parent=43 // pred_check_branch
          %294 = sbr.rel (%p292) target = $region48
        $region47: #{tpu_custom_call.1} parent=43 // pred_region
          %s295 = sand.u32 %s76, 1
          %s296 = scalar_lea.sflag [#allocation4], %s295
          %s297 = sand.u32 %s76, 1
          %s298 = smul.addr %s297, 16
          %s299 = scalar_lea.vmem [#allocation7], %s298
          %300 = dma.done %s296, 256
        $region48: #{tpu_custom_call.1} parent=43 // pred_fallthru
          _
      $region44: #{tpu_custom_call.1} parent=5 // pred_fallthru
        _
    $region6: #{tpu_custom_call.1} parent=1 // loop_footer
      %s19 = sadd.s32 1, %s15
    $region7: #{tpu_custom_call.1} parent=1 // loop_footer_branch
      %14 = sbr.rel target = $region3
    $region8: #{tpu_custom_call.1} parent=1 // loop_exit
      _
    %301 = vsyncpa [#allocation3], 1
    %s302 = scalar_lea.sflag [#allocation3], 1
    %303 = vsyncpa %s302, 1
    %304 = vsyncpa [#allocation6], 1
    %305 = vsyncpa [#allocation4], 1
    %s306 = scalar_lea.sflag [#allocation4], 1
    %307 = vsyncpa %s306, 1

</llo_original>
